<compile_context>
chip_gen: v7x
topology: tpu7x:2x2x1
jax: 0.10.0
libtpu: 0.0.40
codegen_flags: <defaults>
</compile_context>

<pallas_src>
import numpy as np
import jax
import jax.numpy as jnp
from jax import lax
from jax.experimental import pallas as pl
from jax.experimental.pallas import tpu as pltpu


def _largest_divisor_leq(n, cap):
    for d in range(min(n, cap), 0, -1):
        if n % d == 0:
            return d
    return 1


def _pick_bg(B):
    # Fold batch rows into one block (wider matmuls, fewer grid steps), but
    # keep >= 2 grid steps when B >= 2 so both v7x TensorCores get work.
    cap = 8
    if B >= 2:
        cap = min(cap, max(B // 2, 1))
    return _largest_divisor_leq(B, cap)


def _make_kernel(bg, n_pad, n_true, cout):
    """Build the lane-batched kernel for a (bg, C, n_pad) block."""
    W = bg * n_pad
    padded = n_pad != n_true

    def kernel(u_ref, w1_ref, b1_ref, w2_ref, b2_ref,
               w11_ref, b11_ref, w3_ref, b3_ref, o_ref):
        lane = lax.broadcasted_iota(jnp.int32, (1, W), 1)
        pos = lane % n_pad                       # position within each batch row
        first = pos == 0
        last = pos == n_pad - 1
        even = (pos % 2) == 0
        valid = pos < n_true                     # only used when padded

        # Lane-batched operand: bg rows side by side -> (C, bg*n_pad).
        # Each (C, n_pad) piece is a 128-lane multiple, so this is pure vreg
        # placement (no relayout).
        u = jnp.concatenate([u_ref[bi] for bi in range(bg)], axis=-1)

        w1 = w1_ref[...]                         # (2*Cout, 3*Cin) [even; odd taps]
        b1 = b1_ref[...]                         # (Cout, 1)
        w2 = w2_ref[...]                         # (Cout, 3*Cout)
        b2 = b2_ref[...]
        w11 = w11_ref[...]                       # (Cout, 3*Cout)
        b11 = b11_ref[...]
        w3 = w3_ref[...]                         # (Cout, Cout)
        b3 = b3_ref[...]

        def shift_r(a):   # out[:, j] = a[:, j-1]; zero at row starts (pos == 0)
            return jnp.where(first, 0.0, pltpu.roll(a, 1, 1))

        def shift_l(a):   # out[:, j] = a[:, j+1]; zero at row ends (pos == n_pad-1)
            return jnp.where(last, 0.0, pltpu.roll(a, W - 1, 1))

        def mm(w, a):
            return jnp.dot(w, a, preferred_element_type=jnp.float32)

        # conv1 (ConvTranspose1d k=4, s=2, p=1): both parities in one matmul,
        # then a lane-parity select.
        u3 = jnp.concatenate([shift_l(u), u, shift_r(u)], axis=0)       # (3Cin, W)
        r = mm(w1, u3)                                                  # (2Cout, W)
        y = jnp.where(even, r[:cout], r[cout:]) + b1                    # (Cout, W)
        if padded:
            y = jnp.where(valid, y, 0.0)     # keep true zero-padding for conv2

        # conv2 (ConvTranspose1d k=3, s=1, p=1) + ReLU
        y3 = jnp.concatenate([shift_l(y), y, shift_r(y)], axis=0)       # (3Cout, W)
        h = jnp.maximum(mm(w2, y3) + b2, 0.0)
        if padded:
            h = jnp.where(valid, h, 0.0)     # keep true zero-padding for conv11

        # conv11 (k=3, s=1, p=1) + residual + ReLU
        h3 = jnp.concatenate([shift_l(h), h, shift_r(h)], axis=0)       # (3Cout, W)
        a = jnp.maximum(mm(w11, h3) + b11 + y, 0.0)

        # conv3 (1x1): one channel matmul, then per-row lane-dense stores
        # (static 128-multiple lane slices -> tile-aligned, unmasked vst).
        out = mm(w3, a) + b3                                            # (Cout, W)
        for bi in range(bg):
            o_ref[bi] = out[:, bi * n_pad:(bi + 1) * n_pad].astype(o_ref.dtype)

    return kernel


@jax.jit
def identity_block4_forward(x_ncl, params):
    """x_ncl: (B, Cin, L) float32, PyTorch NCL layout.  Returns (B, Cout, 2L)."""
    w1, b1, w2, b2, w11, b11, w3, b3 = params
    B, Cin, L = x_ncl.shape
    Cout = w1.shape[1]
    n = 2 * L
    n_pad = ((n + 127) // 128) * 128             # lane-dense stores (no vst.msk)
    f32 = jnp.float32

    # x2 lane upsample of the (smallest) input: u[:, :, j] = x[:, :, j // 2].
    # (Negligible HBM traffic at these sizes; for very large L this would move
    #  in-kernel so x is only read once from HBM.)
    u = jnp.repeat(x_ncl.astype(f32), 2, axis=2)                        # (B, Cin, 2L)
    if n_pad != n:
        u = jnp.pad(u, ((0, 0), (0, 0), (0, n_pad - n)))                # zero pad

    # --- weight prep: channels-major (out, in) taps stacked on the K axis ---
    w1t = jnp.transpose(w1.astype(f32), (2, 1, 0))                      # (4, Cout, Cin)
    zci = jnp.zeros((Cout, Cin), f32)
    w1_even = jnp.concatenate([zci, w1t[1], w1t[3]], axis=1)            # (Cout, 3Cin)
    w1_odd = jnp.concatenate([w1t[0], w1t[2], zci], axis=1)             # (Cout, 3Cin)
    w1c = jnp.concatenate([w1_even, w1_odd], axis=0)                    # (2Cout, 3Cin)

    def stack3(w):   # ConvTranspose1d(k=3,s=1,p=1), operand order [y_{+1}; y; y_{-1}]
        wt = jnp.transpose(w.astype(f32), (2, 1, 0))                    # (3, Cout, Cout)
        return jnp.concatenate([wt[0], wt[1], wt[2]], axis=1)           # (Cout, 3Cout)

    w2c, w11c = stack3(w2), stack3(w11)
    w3c = w3[:, :, 0].astype(f32)                                       # (Cout, Cout)
    b1c = b1.reshape(Cout, 1).astype(f32)
    b2c = b2.reshape(Cout, 1).astype(f32)
    b11c = b11.reshape(Cout, 1).astype(f32)
    b3c = b3.reshape(Cout, 1).astype(f32)

    bg = _pick_bg(B)                             # batch rows folded per grid step
    kernel = _make_kernel(bg, n_pad, n, Cout)

    out = pl.pallas_call(
        kernel,
        out_shape=jax.ShapeDtypeStruct((B, Cout, n_pad), f32),
        grid=(B // bg,),
        in_specs=[
            pl.BlockSpec((bg, Cin, n_pad), lambda g: (g, 0, 0)),        # u
            pl.BlockSpec((2 * Cout, 3 * Cin), lambda g: (0, 0)),        # w1c
            pl.BlockSpec((Cout, 1), lambda g: (0, 0)),                  # b1
            pl.BlockSpec((Cout, 3 * Cout), lambda g: (0, 0)),           # w2c
            pl.BlockSpec((Cout, 1), lambda g: (0, 0)),                  # b2
            pl.BlockSpec((Cout, 3 * Cout), lambda g: (0, 0)),           # w11c
            pl.BlockSpec((Cout, 1), lambda g: (0, 0)),                  # b11
            pl.BlockSpec((Cout, Cout), lambda g: (0, 0)),               # w3c
            pl.BlockSpec((Cout, 1), lambda g: (0, 0)),                  # b3
        ],
        out_specs=pl.BlockSpec((bg, Cout, n_pad), lambda g: (g, 0, 0)),
        compiler_params=pltpu.CompilerParams(
            dimension_semantics=("parallel",)),
    )(u, w1c, b1c, w2c, b2c, w11c, b11c, w3c, b3c)

    if n_pad != n:
        out = out[:, :, :n]
    return out


# ---------------- numpy reference (exact PyTorch semantics) ----------------

def _conv_transpose1d_np(x, w, b, stride, padding):
    N, Ci, L = x.shape
    _, Co, K = w.shape
    Lout = (L - 1) * stride - 2 * padding + K
    y = np.zeros((N, Co, Lout), dtype=np.float64)
    for s in range(L):
        for k in range(K):
            t = s * stride - padding + k
            if 0 <= t < Lout:
                y[:, :, t] += np.einsum('ni,io->no', x[:, :, s], w[:, :, k])
    return y + b[None, :, None]


def _ref_forward(x, w1, b1, w2, b2, w11, b11, w3, b3):
    x = x.astype(np.float64)
    y1 = _conv_transpose1d_np(x, w1, b1, 2, 1)
    h = np.maximum(_conv_transpose1d_np(y1, w2, b2, 1, 1), 0.0)
    x11 = _conv_transpose1d_np(h, w11, b11, 1, 1) + y1
    r = np.maximum(x11, 0.0)
    out = np.einsum('nil,oi->nol', r, w3[:, :, 0]) + b3[None, :, None]
    return out


if __name__ == "__main__":
    Cin, Cout = 4, 8            # `ra` is unused in the forward pass

    key = jax.random.PRNGKey(0)
    ks = jax.random.split(key, 12)

    # deterministic synthetic parameters (PyTorch param shapes)
    w1 = jax.random.normal(ks[1], (Cin, Cout, 4), dtype=jnp.float32) * 0.2
    b1 = jax.random.normal(ks[2], (Cout,), dtype=jnp.float32) * 0.1
    w2 = jax.random.normal(ks[3], (Cout, Cout, 3), dtype=jnp.float32) * 0.2
    b2 = jax.random.normal(ks[4], (Cout,), dtype=jnp.float32) * 0.1
    w11 = jax.random.normal(ks[5], (Cout, Cout, 3), dtype=jnp.float32) * 0.2
    b11 = jax.random.normal(ks[6], (Cout,), dtype=jnp.float32) * 0.1
    w3 = jax.random.normal(ks[7], (Cout, Cout, 1), dtype=jnp.float32) * 0.2
    b3 = jax.random.normal(ks[8], (Cout,), dtype=jnp.float32) * 0.1
    params = (w1, b1, w2, b2, w11, b11, w3, b3)

    def check(B, L, kx):
        x = jax.random.normal(kx, (B, Cin, L), dtype=jnp.float32)
        out = jax.block_until_ready(identity_block4_forward(x, params))
        assert out.shape == (B, Cout, 2 * L)
        ref = _ref_forward(np.asarray(x), *[np.asarray(p) for p in params])
        np.testing.assert_allclose(np.asarray(out), ref, rtol=1e-3, atol=1e-3)

    check(2, 64, ks[0])    # bg=1, grid=(2,), 2L=128 (no padding)
    check(4, 48, ks[9])    # bg=2, grid=(2,), 2L=96 -> padded to 128 lanes
    check(8, 64, ks[10])   # bg=4, grid=(2,), lane-batched matmul width 512

    print("KERNEL_OK")
</pallas_src>

<mosaic_0001>
module attributes {stable_mosaic.version = 11 : i64} {
  func.func @kernel(%arg0: i32, %arg1: memref<1x4x128xf32, #tpu.memory_space<vmem>>, %arg2: memref<16x12xf32, #tpu.memory_space<vmem>>, %arg3: memref<8x1xf32, #tpu.memory_space<vmem>>, %arg4: memref<8x24xf32, #tpu.memory_space<vmem>>, %arg5: memref<8x1xf32, #tpu.memory_space<vmem>>, %arg6: memref<8x24xf32, #tpu.memory_space<vmem>>, %arg7: memref<8x1xf32, #tpu.memory_space<vmem>>, %arg8: memref<8x8xf32, #tpu.memory_space<vmem>>, %arg9: memref<8x1xf32, #tpu.memory_space<vmem>>, %arg10: memref<1x8x128xf32, #tpu.memory_space<vmem>>) attributes {dimension_semantics = [#tpu.dimension_semantics<parallel>], iteration_bounds = array<i64: 2>, scalar_prefetch = 0 : i64, scratch_operands = 0 : i64, tpu.core_type = #tpu.core_type<tc>, window_params = [{transform_indices = @transform_0, window_bounds = array<i64: 1, 4, 128>}, {pipeline_mode = #tpu.pipeline_mode<synchronous>, transform_indices = @transform_1, window_bounds = array<i64: 16, 12>}, {pipeline_mode = #tpu.pipeline_mode<synchronous>, transform_indices = @transform_2, window_bounds = array<i64: 8, 1>}, {pipeline_mode = #tpu.pipeline_mode<synchronous>, transform_indices = @transform_3, window_bounds = array<i64: 8, 24>}, {pipeline_mode = #tpu.pipeline_mode<synchronous>, transform_indices = @transform_4, window_bounds = array<i64: 8, 1>}, {pipeline_mode = #tpu.pipeline_mode<synchronous>, transform_indices = @transform_5, window_bounds = array<i64: 8, 24>}, {pipeline_mode = #tpu.pipeline_mode<synchronous>, transform_indices = @transform_6, window_bounds = array<i64: 8, 1>}, {pipeline_mode = #tpu.pipeline_mode<synchronous>, transform_indices = @transform_7, window_bounds = array<i64: 8, 8>}, {pipeline_mode = #tpu.pipeline_mode<synchronous>, transform_indices = @transform_8, window_bounds = array<i64: 8, 1>}, {transform_indices = @transform_9, window_bounds = array<i64: 1, 8, 128>}]} {
    %0 = tpu.iota {dimensions = array<i32: 1>} : vector<1x128xi32>
    %c128_i32 = arith.constant 128 : i32
    %c0_i32 = arith.constant 0 : i32
    %1 = arith.cmpi eq, %c128_i32, %c0_i32 : i32
    %c1_i32 = arith.constant 1 : i32
    %2 = arith.select %1, %c1_i32, %c128_i32 : i32
    %3 = vector.broadcast %2 : i32 to vector<1x128xi32>
    %4 = arith.remsi %0, %3 : vector<1x128xi32>
    %c0_i32_0 = arith.constant 0 : i32
    %5 = vector.broadcast %c0_i32_0 : i32 to vector<1x128xi32>
    %6 = arith.cmpi ne, %4, %5 : vector<1x128xi32>
    %c0_i32_1 = arith.constant 0 : i32
    %7 = vector.broadcast %c0_i32_1 : i32 to vector<1x128xi32>
    %8 = arith.cmpi slt, %4, %7 : vector<1x128xi32>
    %c0_i32_2 = arith.constant 0 : i32
    %9 = arith.cmpi slt, %2, %c0_i32_2 : i32
    %10 = vector.broadcast %9 : i1 to vector<1x128xi1>
    %11 = vector.broadcast %10 : vector<1x128xi1> to vector<1x128xi1>
    %12 = arith.xori %8, %11 : vector<1x128xi1>
    %13 = arith.andi %12, %6 : vector<1x128xi1>
    %14 = vector.broadcast %2 : i32 to vector<1x128xi32>
    %15 = arith.addi %4, %14 : vector<1x128xi32>
    %16 = arith.select %13, %15, %4 : vector<1x128xi1>, vector<1x128xi32>
    %c0_i32_3 = arith.constant 0 : i32
    %17 = vector.broadcast %c0_i32_3 : i32 to vector<1x128xi32>
    %18 = arith.cmpi eq, %16, %17 : vector<1x128xi32>
    %c127_i32 = arith.constant 127 : i32
    %19 = vector.broadcast %c127_i32 : i32 to vector<1x128xi32>
    %20 = arith.cmpi eq, %16, %19 : vector<1x128xi32>
    %c2_i32 = arith.constant 2 : i32
    %c0_i32_4 = arith.constant 0 : i32
    %21 = arith.cmpi eq, %c2_i32, %c0_i32_4 : i32
    %c1_i32_5 = arith.constant 1 : i32
    %22 = arith.select %21, %c1_i32_5, %c2_i32 : i32
    %23 = vector.broadcast %22 : i32 to vector<1x128xi32>
    %24 = arith.remsi %16, %23 : vector<1x128xi32>
    %c0_i32_6 = arith.constant 0 : i32
    %25 = vector.broadcast %c0_i32_6 : i32 to vector<1x128xi32>
    %26 = arith.cmpi ne, %24, %25 : vector<1x128xi32>
    %c0_i32_7 = arith.constant 0 : i32
    %27 = vector.broadcast %c0_i32_7 : i32 to vector<1x128xi32>
    %28 = arith.cmpi slt, %24, %27 : vector<1x128xi32>
    %c0_i32_8 = arith.constant 0 : i32
    %29 = arith.cmpi slt, %22, %c0_i32_8 : i32
    %30 = vector.broadcast %29 : i1 to vector<1x128xi1>
    %31 = vector.broadcast %30 : vector<1x128xi1> to vector<1x128xi1>
    %32 = arith.xori %28, %31 : vector<1x128xi1>
    %33 = arith.andi %32, %26 : vector<1x128xi1>
    %34 = vector.broadcast %22 : i32 to vector<1x128xi32>
    %35 = arith.addi %24, %34 : vector<1x128xi32>
    %36 = arith.select %33, %35, %24 : vector<1x128xi1>, vector<1x128xi32>
    %c0_i32_9 = arith.constant 0 : i32
    %37 = vector.broadcast %c0_i32_9 : i32 to vector<1x128xi32>
    %38 = arith.cmpi eq, %36, %37 : vector<1x128xi32>
    %c0 = arith.constant 0 : index
    %c0_10 = arith.constant 0 : index
    %c0_11 = arith.constant 0 : index
    %39 = vector.load %arg1[%c0, %c0_10, %c0_11] : memref<1x4x128xf32, #tpu.memory_space<vmem>>, vector<1x4x128xf32>
    %40 = vector.shape_cast %39 : vector<1x4x128xf32> to vector<4x128xf32>
    %c0_12 = arith.constant 0 : index
    %c0_13 = arith.constant 0 : index
    %41 = vector.load %arg2[%c0_12, %c0_13] : memref<16x12xf32, #tpu.memory_space<vmem>>, vector<16x12xf32>
    %c0_14 = arith.constant 0 : index
    %c0_15 = arith.constant 0 : index
    %42 = vector.load %arg3[%c0_14, %c0_15] : memref<8x1xf32, #tpu.memory_space<vmem>>, vector<8x1xf32>
    %c0_16 = arith.constant 0 : index
    %c0_17 = arith.constant 0 : index
    %43 = vector.load %arg4[%c0_16, %c0_17] : memref<8x24xf32, #tpu.memory_space<vmem>>, vector<8x24xf32>
    %c0_18 = arith.constant 0 : index
    %c0_19 = arith.constant 0 : index
    %44 = vector.load %arg5[%c0_18, %c0_19] : memref<8x1xf32, #tpu.memory_space<vmem>>, vector<8x1xf32>
    %c0_20 = arith.constant 0 : index
    %c0_21 = arith.constant 0 : index
    %45 = vector.load %arg6[%c0_20, %c0_21] : memref<8x24xf32, #tpu.memory_space<vmem>>, vector<8x24xf32>
    %c0_22 = arith.constant 0 : index
    %c0_23 = arith.constant 0 : index
    %46 = vector.load %arg7[%c0_22, %c0_23] : memref<8x1xf32, #tpu.memory_space<vmem>>, vector<8x1xf32>
    %c0_24 = arith.constant 0 : index
    %c0_25 = arith.constant 0 : index
    %47 = vector.load %arg8[%c0_24, %c0_25] : memref<8x8xf32, #tpu.memory_space<vmem>>, vector<8x8xf32>
    %c0_26 = arith.constant 0 : index
    %c0_27 = arith.constant 0 : index
    %48 = vector.load %arg9[%c0_26, %c0_27] : memref<8x1xf32, #tpu.memory_space<vmem>>, vector<8x1xf32>
    %c127_i32_28 = arith.constant 127 : i32
    %49 = tpu.dynamic_rotate %40 by %c127_i32_28 dim 1 : vector<4x128xf32>, i32 -> vector<4x128xf32>
    %cst = arith.constant 0.000000e+00 : f32
    %50 = vector.shape_cast %20 : vector<1x128xi1> to vector<1x128xi1>
    %51 = vector.broadcast %50 : vector<1x128xi1> to vector<4x128xi1>
    %52 = vector.broadcast %cst : f32 to vector<4x128xf32>
    %53 = arith.select %51, %52, %49 : vector<4x128xi1>, vector<4x128xf32>
    %c1_i32_29 = arith.constant 1 : i32
    %54 = tpu.dynamic_rotate %40 by %c1_i32_29 dim 1 : vector<4x128xf32>, i32 -> vector<4x128xf32>
    %cst_30 = arith.constant 0.000000e+00 : f32
    %55 = vector.shape_cast %18 : vector<1x128xi1> to vector<1x128xi1>
    %56 = vector.broadcast %55 : vector<1x128xi1> to vector<4x128xi1>
    %57 = vector.broadcast %cst_30 : f32 to vector<4x128xf32>
    %58 = arith.select %56, %57, %54 : vector<4x128xi1>, vector<4x128xf32>
    %59 = tpu.concatenate %53, %40, %58 in 0 : vector<4x128xf32>, vector<4x128xf32>, vector<4x128xf32> -> vector<12x128xf32>
    %cst_31 = arith.constant dense<0.000000e+00> : vector<16x128xf32>
    %60 = tpu.matmul %41, %59, %cst_31 {dimension_numbers = #tpu.dot_dimension_numbers<[1], [0], [0], [1], [0, 0, 1, 1], [], []>} : vector<16x12xf32>, vector<12x128xf32>, vector<16x128xf32> -> vector<16x128xf32>
    %61 = vector.extract_strided_slice %60 {offsets = [0, 0], sizes = [8, 128], strides = [1, 1]} : vector<16x128xf32> to vector<8x128xf32>
    %62 = vector.extract_strided_slice %60 {offsets = [8, 0], sizes = [8, 128], strides = [1, 1]} : vector<16x128xf32> to vector<8x128xf32>
    %63 = vector.shape_cast %38 : vector<1x128xi1> to vector<1x128xi1>
    %64 = vector.broadcast %63 : vector<1x128xi1> to vector<8x128xi1>
    %65 = arith.select %64, %61, %62 : vector<8x128xi1>, vector<8x128xf32>
    %66 = vector.broadcast %42 : vector<8x1xf32> to vector<8x128xf32>
    %67 = arith.addf %65, %66 : vector<8x128xf32>
    %c127_i32_32 = arith.constant 127 : i32
    %68 = tpu.dynamic_rotate %67 by %c127_i32_32 dim 1 : vector<8x128xf32>, i32 -> vector<8x128xf32>
    %cst_33 = arith.constant 0.000000e+00 : f32
    %69 = vector.shape_cast %20 : vector<1x128xi1> to vector<1x128xi1>
    %70 = vector.broadcast %69 : vector<1x128xi1> to vector<8x128xi1>
    %71 = vector.broadcast %cst_33 : f32 to vector<8x128xf32>
    %72 = arith.select %70, %71, %68 : vector<8x128xi1>, vector<8x128xf32>
    %c1_i32_34 = arith.constant 1 : i32
    %73 = tpu.dynamic_rotate %67 by %c1_i32_34 dim 1 : vector<8x128xf32>, i32 -> vector<8x128xf32>
    %cst_35 = arith.constant 0.000000e+00 : f32
    %74 = vector.shape_cast %18 : vector<1x128xi1> to vector<1x128xi1>
    %75 = vector.broadcast %74 : vector<1x128xi1> to vector<8x128xi1>
    %76 = vector.broadcast %cst_35 : f32 to vector<8x128xf32>
    %77 = arith.select %75, %76, %73 : vector<8x128xi1>, vector<8x128xf32>
    %78 = tpu.concatenate %72, %67, %77 in 0 : vector<8x128xf32>, vector<8x128xf32>, vector<8x128xf32> -> vector<24x128xf32>
    %cst_36 = arith.constant dense<0.000000e+00> : vector<8x128xf32>
    %79 = tpu.matmul %43, %78, %cst_36 {dimension_numbers = #tpu.dot_dimension_numbers<[1], [0], [0], [1], [0, 0, 1, 1], [], []>} : vector<8x24xf32>, vector<24x128xf32>, vector<8x128xf32> -> vector<8x128xf32>
    %80 = vector.broadcast %44 : vector<8x1xf32> to vector<8x128xf32>
    %81 = arith.addf %79, %80 : vector<8x128xf32>
    %cst_37 = arith.constant 0.000000e+00 : f32
    %82 = vector.broadcast %cst_37 : f32 to vector<8x128xf32>
    %83 = arith.maximumf %81, %82 : vector<8x128xf32>
    %c127_i32_38 = arith.constant 127 : i32
    %84 = tpu.dynamic_rotate %83 by %c127_i32_38 dim 1 : vector<8x128xf32>, i32 -> vector<8x128xf32>
    %cst_39 = arith.constant 0.000000e+00 : f32
    %85 = vector.shape_cast %20 : vector<1x128xi1> to vector<1x128xi1>
    %86 = vector.broadcast %85 : vector<1x128xi1> to vector<8x128xi1>
    %87 = vector.broadcast %cst_39 : f32 to vector<8x128xf32>
    %88 = arith.select %86, %87, %84 : vector<8x128xi1>, vector<8x128xf32>
    %c1_i32_40 = arith.constant 1 : i32
    %89 = tpu.dynamic_rotate %83 by %c1_i32_40 dim 1 : vector<8x128xf32>, i32 -> vector<8x128xf32>
    %cst_41 = arith.constant 0.000000e+00 : f32
    %90 = vector.shape_cast %18 : vector<1x128xi1> to vector<1x128xi1>
    %91 = vector.broadcast %90 : vector<1x128xi1> to vector<8x128xi1>
    %92 = vector.broadcast %cst_41 : f32 to vector<8x128xf32>
    %93 = arith.select %91, %92, %89 : vector<8x128xi1>, vector<8x128xf32>
    %94 = tpu.concatenate %88, %83, %93 in 0 : vector<8x128xf32>, vector<8x128xf32>, vector<8x128xf32> -> vector<24x128xf32>
    %cst_42 = arith.constant dense<0.000000e+00> : vector<8x128xf32>
    %95 = tpu.matmul %45, %94, %cst_42 {dimension_numbers = #tpu.dot_dimension_numbers<[1], [0], [0], [1], [0, 0, 1, 1], [], []>} : vector<8x24xf32>, vector<24x128xf32>, vector<8x128xf32> -> vector<8x128xf32>
    %96 = vector.broadcast %46 : vector<8x1xf32> to vector<8x128xf32>
    %97 = arith.addf %95, %96 : vector<8x128xf32>
    %98 = arith.addf %97, %67 : vector<8x128xf32>
    %cst_43 = arith.constant 0.000000e+00 : f32
    %99 = vector.broadcast %cst_43 : f32 to vector<8x128xf32>
    %100 = arith.maximumf %98, %99 : vector<8x128xf32>
    %cst_44 = arith.constant dense<0.000000e+00> : vector<8x128xf32>
    %101 = tpu.matmul %47, %100, %cst_44 {dimension_numbers = #tpu.dot_dimension_numbers<[1], [0], [0], [1], [0, 0, 1, 1], [], []>} : vector<8x8xf32>, vector<8x128xf32>, vector<8x128xf32> -> vector<8x128xf32>
    %102 = vector.broadcast %48 : vector<8x1xf32> to vector<8x128xf32>
    %103 = arith.addf %101, %102 : vector<8x128xf32>
    %c0_45 = arith.constant 0 : index
    %c0_46 = arith.constant 0 : index
    %c0_47 = arith.constant 0 : index
    %104 = vector.load %arg10[%c0_45, %c0_46, %c0_47] : memref<1x8x128xf32, #tpu.memory_space<vmem>>, vector<1x8x128xf32>
    %105 = vector.shape_cast %104 : vector<1x8x128xf32> to vector<8x128xf32>
    %106 = vector.shape_cast %103 : vector<8x128xf32> to vector<1x8x128xf32>
    tpu.vector_store %arg10[%c0_45, %c0_46, %c0_47], %106 {strides = array<i32>} : memref<1x8x128xf32, #tpu.memory_space<vmem>>, vector<1x8x128xf32>,
    return
  }
  func.func @transform_0(%arg0: i32) -> (i32, i32, i32) {
    %c0_i32 = arith.constant 0 : i32
    %c0_i32_0 = arith.constant 0 : i32
    %c0_i32_1 = arith.constant 0 : i32
    return %arg0, %c0_i32, %c0_i32_0 : i32, i32, i32
  }
  func.func @transform_1(%arg0: i32) -> (i32, i32) {
    %c0_i32 = arith.constant 0 : i32
    %c0_i32_0 = arith.constant 0 : i32
    %c0_i32_1 = arith.constant 0 : i32
    return %c0_i32, %c0_i32_0 : i32, i32
  }
  func.func @transform_2(%arg0: i32) -> (i32, i32) {
    %c0_i32 = arith.constant 0 : i32
    %c0_i32_0 = arith.constant 0 : i32
    %c0_i32_1 = arith.constant 0 : i32
    return %c0_i32, %c0_i32_0 : i32, i32
  }
  func.func @transform_3(%arg0: i32) -> (i32, i32) {
    %c0_i32 = arith.constant 0 : i32
    %c0_i32_0 = arith.constant 0 : i32
    %c0_i32_1 = arith.constant 0 : i32
    return %c0_i32, %c0_i32_0 : i32, i32
  }
  func.func @transform_4(%arg0: i32) -> (i32, i32) {
    %c0_i32 = arith.constant 0 : i32
    %c0_i32_0 = arith.constant 0 : i32
    %c0_i32_1 = arith.constant 0 : i32
    return %c0_i32, %c0_i32_0 : i32, i32
  }
  func.func @transform_5(%arg0: i32) -> (i32, i32) {
    %c0_i32 = arith.constant 0 : i32
    %c0_i32_0 = arith.constant 0 : i32
    %c0_i32_1 = arith.constant 0 : i32
    return %c0_i32, %c0_i32_0 : i32, i32
  }
  func.func @transform_6(%arg0: i32) -> (i32, i32) {
    %c0_i32 = arith.constant 0 : i32
    %c0_i32_0 = arith.constant 0 : i32
    %c0_i32_1 = arith.constant 0 : i32
    return %c0_i32, %c0_i32_0 : i32, i32
  }
  func.func @transform_7(%arg0: i32) -> (i32, i32) {
    %c0_i32 = arith.constant 0 : i32
    %c0_i32_0 = arith.constant 0 : i32
    %c0_i32_1 = arith.constant 0 : i32
    return %c0_i32, %c0_i32_0 : i32, i32
  }
  func.func @transform_8(%arg0: i32) -> (i32, i32) {
    %c0_i32 = arith.constant 0 : i32
    %c0_i32_0 = arith.constant 0 : i32
    %c0_i32_1 = arith.constant 0 : i32
    return %c0_i32, %c0_i32_0 : i32, i32
  }
  func.func @transform_9(%arg0: i32) -> (i32, i32, i32) {
    %c0_i32 = arith.constant 0 : i32
    %c0_i32_0 = arith.constant 0 : i32
    %c0_i32_1 = arith.constant 0 : i32
    return %arg0, %c0_i32, %c0_i32_0 : i32, i32, i32
  }
}

</mosaic_0001>

<llo_original>
// kernel: identity_block4_forward.1
$region0: #{identity_block4_forward.1}
  #allocation0 [shape = 'u32[]', space=smem, size = 0x4, offset = 0x4, fixed_abs, tag = 'smem constant byte address 0x4 - core index']
  #allocation1 [shape = 'u32[144,128]{1,0:T(1,128)}', space=vmem, size = 0x12000, scoped, tag = 'internal scratch']
  %s0 = inlined_call_operand.vmem [shape: f32[2,4,128], index: 0, kind: input, shape index: {}]
  %s1 = inlined_call_operand.vmem [shape: f32[16,12], index: 1, kind: input, shape index: {}]
  %s2 = inlined_call_operand.vmem [shape: f32[8,1], index: 2, kind: input, shape index: {}]
  %s3 = inlined_call_operand.vmem [shape: f32[8,24], index: 3, kind: input, shape index: {}]
  %s4 = inlined_call_operand.vmem [shape: f32[8,1], index: 4, kind: input, shape index: {}]
  %s5 = inlined_call_operand.vmem [shape: f32[8,24], index: 5, kind: input, shape index: {}]
  %s6 = inlined_call_operand.vmem [shape: f32[8,1], index: 6, kind: input, shape index: {}]
  %s7 = inlined_call_operand.vmem [shape: f32[8,8], index: 7, kind: input, shape index: {}]
  %s8 = inlined_call_operand.vmem [shape: f32[8,1], index: 8, kind: input, shape index: {}]
  %s9 = inlined_call_operand.hbm [shape: f32[2,8,128], index: 9, kind: output, shape index: {}]
  %s10 = sld [smem:[#allocation0]]
  $region69: #{identity_block4_forward.1} parent=0
    _
  %s12 = ssub.s32 1, %s10
  %s13 = scalar_select 0, %s12, %s10
  $region1: #{identity_block4_forward.1} parent=0
    #allocation2 [shape = 'u8[8192]{0}', space=vmem, size = 0x2000, scoped, tag = 'output window, operand 0']
    #allocation3 [shape = 's32[2]{0}', space=sflag, size = 0x8, scoped, tag = 'scoped memory for identity_block4_forward.1']
    %14 = vsyncpa [#allocation3], 0
    %s15 = scalar_lea.sflag [#allocation3], 1
    %16 = vsyncpa %s15, 0
    loop: start=0, step=1, limit=4
    $region2: #{identity_block4_forward.1} parent=1 // loop_pre_header
      _
    $region3: #{identity_block4_forward.1} parent=1 // loop_header
      %s18 = sphi 0, %s22
      %p19 = scmp.ge.s32.totalorder %s18, 4
      %s28 = sphi 0, %s30
      %s31 = sphi 0, %s28
      %s32 = sphi 0, %s31
      %s48 = sphi 0, %s32
      %s52 = sphi 0, %s52
      %s54 = sphi 0, %s52
      %s55 = sphi 0, %s54
      %s69 = sphi 0, %s55
      %s73 = sphi 0, %s73
      %s75 = sphi 0, %s73
      %s76 = sphi 0, %s75
      %s90 = sphi 0, %s76
      %s94 = sphi 0, %s94
      %s96 = sphi 0, %s94
      %s97 = sphi 0, %s96
      %s111 = sphi 0, %s97
      %s115 = sphi 0, %s115
      %s117 = sphi 0, %s115
      %s118 = sphi 0, %s117
      %s132 = sphi 0, %s118
      %s136 = sphi 0, %s136
      %s138 = sphi 0, %s136
      %s139 = sphi 0, %s138
      %s153 = sphi 0, %s139
      %s157 = sphi 0, %s157
      %s159 = sphi 0, %s157
      %s160 = sphi 0, %s159
      %s174 = sphi 0, %s160
      %s178 = sphi 0, %s178
      %s180 = sphi 0, %s178
      %s181 = sphi 0, %s180
      %s195 = sphi 0, %s181
      %s199 = sphi 0, %s199
      %s201 = sphi 0, %s199
      %s202 = sphi 0, %s201
      %s216 = sphi 0, %s202
      %s222 = sphi 0, %s224
      %s225 = sphi 0, %s222
      %s226 = sphi 0, %s225
      %s242 = sphi 0, %s226
    $region4: #{identity_block4_forward.1} parent=1 // loop_header_branch
      %21 = sbr.rel (%p19) target = $region8
    $region5: #{identity_block4_forward.1} parent=1 // loop_body
      %s23 = ssub.s32 %s18, 1
      %s24 = ssub.s32 %s18, 2
      %s25 = sadd.s32 %s18, 1
      %s26 = ssub.s32 %s18, %s25
      %p27 = scmp.eq.s32.totalorder %s26, 0
      %s29 = sadd.s32 %s28, 1
      %s30 = scalar_select %p27, %s28, %s29
      %p33 = pneg %p27
      %p34 = scmp.eq.s32.totalorder %s18, 1
      %p35 = por %p33, %p34
      %p36 = scmp.ne.s32.totalorder %s28, %s31
      %p37 = scmp.eq.s32.totalorder %s18, 0
      %p38 = por %p36, %p37
      %p39 = scmp.ne.s32.totalorder %s28, %s31
      %p40 = scmp.eq.s32.totalorder %s23, 1
      %p41 = por %p39, %p40
      %p42 = scmp.ne.s32.totalorder %s31, %s32
      %p43 = scmp.eq.s32.totalorder %s23, 0
      %p44 = por %p42, %p43
      %p45 = scmp.ne.s32.totalorder %s31, %s32
      %p46 = scmp.eq.s32.totalorder %s24, 1
      %p47 = por %p45, %p46
      %p49 = scmp.ne.s32.totalorder %s32, %s48
      %p50 = scmp.eq.s32.totalorder %s24, 0
      %p51 = por %p49, %p50
      %s53 = sadd.s32 %s52, 1
      %p56 = scmp.eq.s32.totalorder %s18, 1
      %p57 = scmp.ne.s32.totalorder %s52, %s54
      %p58 = scmp.eq.s32.totalorder %s18, 0
      %p59 = por %p57, %p58
      %p60 = scmp.ne.s32.totalorder %s52, %s54
      %p61 = scmp.eq.s32.totalorder %s23, 1
      %p62 = por %p60, %p61
      %p63 = scmp.ne.s32.totalorder %s54, %s55
      %p64 = scmp.eq.s32.totalorder %s23, 0
      %p65 = por %p63, %p64
      %p66 = scmp.ne.s32.totalorder %s54, %s55
      %p67 = scmp.eq.s32.totalorder %s24, 1
      %p68 = por %p66, %p67
      %p70 = scmp.ne.s32.totalorder %s55, %s69
      %p71 = scmp.eq.s32.totalorder %s24, 0
      %p72 = por %p70, %p71
      %s74 = sadd.s32 %s73, 1
      %p77 = scmp.eq.s32.totalorder %s18, 1
      %p78 = scmp.ne.s32.totalorder %s73, %s75
      %p79 = scmp.eq.s32.totalorder %s18, 0
      %p80 = por %p78, %p79
      %p81 = scmp.ne.s32.totalorder %s73, %s75
      %p82 = scmp.eq.s32.totalorder %s23, 1
      %p83 = por %p81, %p82
      %p84 = scmp.ne.s32.totalorder %s75, %s76
      %p85 = scmp.eq.s32.totalorder %s23, 0
      %p86 = por %p84, %p85
      %p87 = scmp.ne.s32.totalorder %s75, %s76
      %p88 = scmp.eq.s32.totalorder %s24, 1
      %p89 = por %p87, %p88
      %p91 = scmp.ne.s32.totalorder %s76, %s90
      %p92 = scmp.eq.s32.totalorder %s24, 0
      %p93 = por %p91, %p92
      %s95 = sadd.s32 %s94, 1
      %p98 = scmp.eq.s32.totalorder %s18, 1
      %p99 = scmp.ne.s32.totalorder %s94, %s96
      %p100 = scmp.eq.s32.totalorder %s18, 0
      %p101 = por %p99, %p100
      %p102 = scmp.ne.s32.totalorder %s94, %s96
      %p103 = scmp.eq.s32.totalorder %s23, 1
      %p104 = por %p102, %p103
      %p105 = scmp.ne.s32.totalorder %s96, %s97
      %p106 = scmp.eq.s32.totalorder %s23, 0
      %p107 = por %p105, %p106
      %p108 = scmp.ne.s32.totalorder %s96, %s97
      %p109 = scmp.eq.s32.totalorder %s24, 1
      %p110 = por %p108, %p109
      %p112 = scmp.ne.s32.totalorder %s97, %s111
      %p113 = scmp.eq.s32.totalorder %s24, 0
      %p114 = por %p112, %p113
      %s116 = sadd.s32 %s115, 1
      %p119 = scmp.eq.s32.totalorder %s18, 1
      %p120 = scmp.ne.s32.totalorder %s115, %s117
      %p121 = scmp.eq.s32.totalorder %s18, 0
      %p122 = por %p120, %p121
      %p123 = scmp.ne.s32.totalorder %s115, %s117
      %p124 = scmp.eq.s32.totalorder %s23, 1
      %p125 = por %p123, %p124
      %p126 = scmp.ne.s32.totalorder %s117, %s118
      %p127 = scmp.eq.s32.totalorder %s23, 0
      %p128 = por %p126, %p127
      %p129 = scmp.ne.s32.totalorder %s117, %s118
      %p130 = scmp.eq.s32.totalorder %s24, 1
      %p131 = por %p129, %p130
      %p133 = scmp.ne.s32.totalorder %s118, %s132
      %p134 = scmp.eq.s32.totalorder %s24, 0
      %p135 = por %p133, %p134
      %s137 = sadd.s32 %s136, 1
      %p140 = scmp.eq.s32.totalorder %s18, 1
      %p141 = scmp.ne.s32.totalorder %s136, %s138
      %p142 = scmp.eq.s32.totalorder %s18, 0
      %p143 = por %p141, %p142
      %p144 = scmp.ne.s32.totalorder %s136, %s138
      %p145 = scmp.eq.s32.totalorder %s23, 1
      %p146 = por %p144, %p145
      %p147 = scmp.ne.s32.totalorder %s138, %s139
      %p148 = scmp.eq.s32.totalorder %s23, 0
      %p149 = por %p147, %p148
      %p150 = scmp.ne.s32.totalorder %s138, %s139
      %p151 = scmp.eq.s32.totalorder %s24, 1
      %p152 = por %p150, %p151
      %p154 = scmp.ne.s32.totalorder %s139, %s153
      %p155 = scmp.eq.s32.totalorder %s24, 0
      %p156 = por %p154, %p155
      %s158 = sadd.s32 %s157, 1
      %p161 = scmp.eq.s32.totalorder %s18, 1
      %p162 = scmp.ne.s32.totalorder %s157, %s159
      %p163 = scmp.eq.s32.totalorder %s18, 0
      %p164 = por %p162, %p163
      %p165 = scmp.ne.s32.totalorder %s157, %s159
      %p166 = scmp.eq.s32.totalorder %s23, 1
      %p167 = por %p165, %p166
      %p168 = scmp.ne.s32.totalorder %s159, %s160
      %p169 = scmp.eq.s32.totalorder %s23, 0
      %p170 = por %p168, %p169
      %p171 = scmp.ne.s32.totalorder %s159, %s160
      %p172 = scmp.eq.s32.totalorder %s24, 1
      %p173 = por %p171, %p172
      %p175 = scmp.ne.s32.totalorder %s160, %s174
      %p176 = scmp.eq.s32.totalorder %s24, 0
      %p177 = por %p175, %p176
      %s179 = sadd.s32 %s178, 1
      %p182 = scmp.eq.s32.totalorder %s18, 1
      %p183 = scmp.ne.s32.totalorder %s178, %s180
      %p184 = scmp.eq.s32.totalorder %s18, 0
      %p185 = por %p183, %p184
      %p186 = scmp.ne.s32.totalorder %s178, %s180
      %p187 = scmp.eq.s32.totalorder %s23, 1
      %p188 = por %p186, %p187
      %p189 = scmp.ne.s32.totalorder %s180, %s181
      %p190 = scmp.eq.s32.totalorder %s23, 0
      %p191 = por %p189, %p190
      %p192 = scmp.ne.s32.totalorder %s180, %s181
      %p193 = scmp.eq.s32.totalorder %s24, 1
      %p194 = por %p192, %p193
      %p196 = scmp.ne.s32.totalorder %s181, %s195
      %p197 = scmp.eq.s32.totalorder %s24, 0
      %p198 = por %p196, %p197
      %s200 = sadd.s32 %s199, 1
      %p203 = scmp.eq.s32.totalorder %s18, 1
      %p204 = scmp.ne.s32.totalorder %s199, %s201
      %p205 = scmp.eq.s32.totalorder %s18, 0
      %p206 = por %p204, %p205
      %p207 = scmp.ne.s32.totalorder %s199, %s201
      %p208 = scmp.eq.s32.totalorder %s23, 1
      %p209 = por %p207, %p208
      %p210 = scmp.ne.s32.totalorder %s201, %s202
      %p211 = scmp.eq.s32.totalorder %s23, 0
      %p212 = por %p210, %p211
      %p213 = scmp.ne.s32.totalorder %s201, %s202
      %p214 = scmp.eq.s32.totalorder %s24, 1
      %p215 = por %p213, %p214
      %p217 = scmp.ne.s32.totalorder %s202, %s216
      %p218 = scmp.eq.s32.totalorder %s24, 0
      %p219 = por %p217, %p218
      %s220 = ssub.s32 %s18, %s25
      %p221 = scmp.eq.s32.totalorder %s220, 0
      %s223 = sadd.s32 %s222, 1
      %s224 = scalar_select %p221, %s222, %s223
      %p227 = pneg %p221
      %p228 = scmp.eq.s32.totalorder %s18, 1
      %p229 = por %p227, %p228
      %p230 = scmp.ne.s32.totalorder %s222, %s225
      %p231 = scmp.eq.s32.totalorder %s18, 0
      %p232 = por %p230, %p231
      %p233 = scmp.ne.s32.totalorder %s222, %s225
      %p234 = scmp.eq.s32.totalorder %s23, 1
      %p235 = por %p233, %p234
      %p236 = scmp.ne.s32.totalorder %s225, %s226
      %p237 = scmp.eq.s32.totalorder %s23, 0
      %p238 = por %p236, %p237
      %p239 = scmp.ne.s32.totalorder %s225, %s226
      %p240 = scmp.eq.s32.totalorder %s24, 1
      %p241 = por %p239, %p240
      %p243 = scmp.ne.s32.totalorder %s226, %s242
      %p244 = scmp.eq.s32.totalorder %s24, 0
      %p245 = por %p243, %p244
      %p246 = scmp.le.s32.totalorder 1, %s18
      %p247 = scmp.lt.s32.totalorder %s18, 3
      %p248 = pnand %p246, %p247
      %p249 = pneg %p248
      // Predicated region
      $region9: #{identity_block4_forward.1} parent=5 // pred_check
        _
      $region10: #{identity_block4_forward.1} parent=5 // pred_check_branch
        %251 = sbr.rel (%p248) target = $region12
      $region11: #{identity_block4_forward.1} parent=5 // pred_region
        %s252 = ssub.s32 %s18, 1
        // Predicated region
        $region13: #{identity_block4_forward.1} parent=11 // pred_check
          %p253 = pneg %p65
        $region14: #{identity_block4_forward.1} parent=11 // pred_check_branch
          %255 = sbr.rel (%p253) target = $region16
        $region15: #{identity_block4_forward.1} parent=11 // pred_region
          _
        $region16: #{identity_block4_forward.1} parent=11 // pred_fallthru
          _
        // Predicated region
        $region17: #{identity_block4_forward.1} parent=11 // pred_check
          %p256 = pneg %p86
        $region18: #{identity_block4_forward.1} parent=11 // pred_check_branch
          %258 = sbr.rel (%p256) target = $region20
        $region19: #{identity_block4_forward.1} parent=11 // pred_region
          _
        $region20: #{identity_block4_forward.1} parent=11 // pred_fallthru
          _
        // Predicated region
        $region21: #{identity_block4_forward.1} parent=11 // pred_check
          %p259 = pneg %p107
        $region22: #{identity_block4_forward.1} parent=11 // pred_check_branch
          %261 = sbr.rel (%p259) target = $region24
        $region23: #{identity_block4_forward.1} parent=11 // pred_region
          _
        $region24: #{identity_block4_forward.1} parent=11 // pred_fallthru
          _
        // Predicated region
        $region25: #{identity_block4_forward.1} parent=11 // pred_check
          %p262 = pneg %p128
        $region26: #{identity_block4_forward.1} parent=11 // pred_check_branch
          %264 = sbr.rel (%p262) target = $region28
        $region27: #{identity_block4_forward.1} parent=11 // pred_region
          _
        $region28: #{identity_block4_forward.1} parent=11 // pred_fallthru
          _
        // Predicated region
        $region29: #{identity_block4_forward.1} parent=11 // pred_check
          %p265 = pneg %p149
        $region30: #{identity_block4_forward.1} parent=11 // pred_check_branch
          %267 = sbr.rel (%p265) target = $region32
        $region31: #{identity_block4_forward.1} parent=11 // pred_region
          _
        $region32: #{identity_block4_forward.1} parent=11 // pred_fallthru
          _
        // Predicated region
        $region33: #{identity_block4_forward.1} parent=11 // pred_check
          %p268 = pneg %p170
        $region34: #{identity_block4_forward.1} parent=11 // pred_check_branch
          %270 = sbr.rel (%p268) target = $region36
        $region35: #{identity_block4_forward.1} parent=11 // pred_region
          _
        $region36: #{identity_block4_forward.1} parent=11 // pred_fallthru
          _
        // Predicated region
        $region37: #{identity_block4_forward.1} parent=11 // pred_check
          %p271 = pneg %p191
        $region38: #{identity_block4_forward.1} parent=11 // pred_check_branch
          %273 = sbr.rel (%p271) target = $region40
        $region39: #{identity_block4_forward.1} parent=11 // pred_region
          _
        $region40: #{identity_block4_forward.1} parent=11 // pred_fallthru
          _
        // Predicated region
        $region41: #{identity_block4_forward.1} parent=11 // pred_check
          %p274 = pneg %p212
        $region42: #{identity_block4_forward.1} parent=11 // pred_check_branch
          %276 = sbr.rel (%p274) target = $region44
        $region43: #{identity_block4_forward.1} parent=11 // pred_region
          _
        $region44: #{identity_block4_forward.1} parent=11 // pred_fallthru
          _
      $region12: #{identity_block4_forward.1} parent=5 // pred_fallthru
        _
      %p277 = scmp.lt.s32.totalorder %s18, 2
      // Predicated region
      $region45: #{identity_block4_forward.1} parent=5 // pred_check
        %p278 = pneg %p277
      $region46: #{identity_block4_forward.1} parent=5 // pred_check_branch
        %280 = sbr.rel (%p278) target = $region48
      $region47: #{identity_block4_forward.1} parent=5 // pred_region
        // Predicated region
        $region49: #{identity_block4_forward.1} parent=47 // pred_check
          %p281 = pneg %p38
        $region50: #{identity_block4_forward.1} parent=47 // pred_check_branch
          %283 = sbr.rel (%p281) target = $region52
        $region51: #{identity_block4_forward.1} parent=47 // pred_region
          %p284 = scmp.lt.s32.totalorder %s18, 1
          %s285 = scalar_select %p284, %s18, 1
          %s286 = smul.addr %s285, 4
          %s287 = scalar_lea.vmem %s0, %s286
        $region52: #{identity_block4_forward.1} parent=47 // pred_fallthru
          _
      $region48: #{identity_block4_forward.1} parent=5 // pred_fallthru
        _
      %p288 = scmp.le.s32.totalorder 1, %s18
      %p289 = scmp.lt.s32.totalorder %s18, 3
      %p290 = pnand %p288, %p289
      %p291 = pneg %p290
      // Predicated region
      $region53: #{identity_block4_forward.1} parent=5 // pred_check
        _
      $region54: #{identity_block4_forward.1} parent=5 // pred_check_branch
        %293 = sbr.rel (%p290) target = $region56
      $region55: #{identity_block4_forward.1} parent=5 // pred_region
        %s294 = ssub.s32 %s18, 1
        %p295 = scmp.lt.s32.totalorder %s23, 1
        %s296 = scalar_select %p295, %s23, 1
        %s297 = smul.addr %s296, 4
        %s298 = scalar_lea.vmem %s0, %s297
        %p299 = pneg %p44
        %p300 = pneg %p41
        %p301 = pneg %p65
        %p302 = pneg %p62
        %p303 = pneg %p86
        %p304 = pneg %p83
        %p305 = pneg %p107
        %p306 = pneg %p104
        %p307 = pneg %p128
        %p308 = pneg %p125
        %p309 = pneg %p149
        %p310 = pneg %p146
        %p311 = pneg %p170
        %p312 = pneg %p167
        %p313 = pneg %p191
        %p314 = pneg %p188
        %p315 = pneg %p212
        %p316 = pneg %p209
        %p317 = pneg %p238
        %p318 = pneg %p235
        %s319 = sand.u32 %s225, 1
        %s320 = scalar_lea.sflag [#allocation3], %s319
        %s321 = sand.u32 %s225, 1
        %s322 = smul.addr %s321, 8
        %s323 = scalar_lea.vmem [#allocation2], %s322
        %p324 = scmp.lt.s32.totalorder %s23, 1
        %s325 = scalar_select %p324, %s23, 1
        %s326 = smul.addr %s325, 4
        %s327 = scalar_lea.vmem %s0, %s326
        %v328 = vlaneseq
        %v329 = vand.u32 %v328, 127
        %vm330 = vcmp.lt.s32.totalorder %v329, 0
        %v331 = vsub.s32 0, %v329
        %v332 = vsel %vm330, %v331, %v329
        %v333 = vshrl.u32 %v332, 7
        %v334 = vand.u32 %v332, 127
        %v335 = vsub.s32 0, %v334
        %v336 = vsel %vm330, %v335, %v334
        %vm337 = vcmp.ne.s32.totalorder %v336, 0
        %vm338 = vcmp.lt.s32.totalorder %v336, 0
        %vm339 = vmand %vm338, %vm337
        %v340 = vadd.s32 %v336, 128
        %v341 = vsel %vm339, %v340, %v336
        %vm342 = vcmp.eq.s32.totalorder %v341, 0
        %vm343 = vcmp.eq.s32.totalorder %v341, 127
        %vm344 = vcmp.lt.s32.totalorder %v341, 0
        %v345 = vsub.s32 0, %v341
        %v346 = vsel %vm344, %v345, %v341
        %v347 = vshrl.u32 %v346, 1
        %v348 = vand.u32 %v346, 1
        %v349 = vsub.s32 0, %v348
        %v350 = vsel %vm344, %v349, %v348
        %vm351 = vcmp.ne.s32.totalorder %v350, 0
        %vm352 = vcmp.lt.s32.totalorder %v350, 0
        %vm353 = vmand %vm352, %vm351
        %v354 = vadd.s32 %v350, 2
        %v355 = vsel %vm353, %v354, %v350
        %vm356 = vcmp.eq.s32.totalorder %v355, 0
        %v357 = vld [vmem:[%s327] sm:$0xf]
        %v358 = vld [vmem:[%s1] sm:$0xff]
        %v359 = vld [vmem:[%s1 + $0x8] sm:$0xff]
        %v360 = vld [vmem:[%s2] sm:$0xff]
        %v361 = vld [vmem:[%s3] sm:$0xff]
        %v362 = vld [vmem:[%s4] sm:$0xff]
        %v363 = vld [vmem:[%s5] sm:$0xff]
        %v364 = vld [vmem:[%s6] sm:$0xff]
        %v365 = vld [vmem:[%s7] sm:$0xff]
        %v366 = vld [vmem:[%s8] sm:$0xff]
        %367 = vrot.lane.b32.xlu0 %v357, 127
        %v368 = vpop.permute.xlu0 %367
        %v369 = vsel %vm343, 1, 0
        %vm370 = vcmp.eq.s32.totalorder %v369, 1
        %v371 = vsel %vm370, 0.0, %v368
        %372 = vrot.lane.b32.xlu0 %v357, 1
        %v373 = vpop.permute.xlu0 %372
        %v374 = vsel %vm342, 1, 0
        %vm375 = vcmp.eq.s32.totalorder %v374, 1
        %v376 = vsel %vm375, 0.0, %v373
        %v378 = vrot.slane %v357, 4
        %vm380 = vcmask 1043456
        %v381 = vsel %vm380, %v371, %v378
        %vm382 = vcmask 97280
        %v384 = vsel %vm382, %v358, 0
        %v387 = vsel %vm382, %v359, 0
        %v390 = vsel %vm380, %v376, 0
        %392 = vmatprep.subr.mxu0 0.0
        %393 = vmatpush1.msra.mxu0 %v381
        %394 = vmatprep.subr.mxu0 0.0
        %395 = vmatpush1.msra.mxu0 %v390
        %396 = vmatprep.subr.mxu0 0.0
        %397 = vmatpush1.msra.mxu0 0.0
        %398 = vmatprep.subr.mxu0 0.0
        %399 = vmatpush1.msra.mxu0 0.0
        %400 = vmatprep.subr.mxu0 0.0
        %401 = vmatpush1.msra.mxu0 0.0
        %402 = vmatprep.subr.mxu0 0.0
        %403 = vmatpush1.msra.mxu0 0.0
        %404 = vmatprep.subr.mxu0 0.0
        %405 = vmatpush1.msra.mxu0 0.0
        %406 = vmatprep.subr.mxu0 0.0
        %407 = vmatpush1.msra.mxu0 0.0
        %408 = vmatprep.subr.mxu0 0.0
        %409 = vmatpush1.msra.mxu0 0.0
        %410 = vmatprep.subr.mxu0 0.0
        %411 = vmatpush1.msra.mxu0 0.0
        %412 = vmatprep.subr.mxu0 0.0
        %413 = vmatpush1.msra.mxu0 0.0
        %414 = vmatprep.subr.mxu0 0.0
        %415 = vmatpush1.msra.mxu0 0.0
        %416 = vmatprep.subr.mxu0 0.0
        %417 = vmatpush1.msra.mxu0 0.0
        %418 = vmatprep.subr.mxu0 0.0
        %419 = vmatpush1.msra.mxu0 0.0
        %420 = vmatprep.subr.mxu0 0.0
        %421 = vmatpush1.msra.mxu0 0.0
        %422 = vmatprep.subr.mxu0 0.0
        %423 = vmatpush1.msra.mxu0 0.0
        %424 = vmatprep.subr.mxu0 0.0
        %425 = vmatpush1.msra.mxu0 0.0
        %426 = vmatprep.subr.mxu0 0.0
        %427 = vmatpush1.msra.mxu0 0.0
        %428 = vmatprep.subr.mxu0 0.0
        %429 = vmatpush1.msra.mxu0 0.0
        %430 = vmatprep.subr.mxu0 0.0
        %431 = vmatpush1.msra.mxu0 0.0
        %432 = vmatprep.subr.mxu0 0.0
        %433 = vmatpush1.msra.mxu0 0.0
        %434 = vmatprep.subr.mxu0 0.0
        %435 = vmatpush1.msra.mxu0 0.0
        %436 = vmatprep.subr.mxu0 0.0
        %437 = vmatpush1.msra.mxu0 0.0
        %438 = vmatprep.subr.mxu0 0.0
        %439 = vmatpush1.msra.mxu0 0.0
        %440 = vmatprep.subr.mxu0 0.0
        %441 = vmatpush1.msra.mxu0 0.0
        %442 = vmatprep.subr.mxu0 0.0
        %443 = vmatpush1.msra.mxu0 0.0
        %444 = vmatprep.subr.mxu0 0.0
        %445 = vmatpush1.msra.mxu0 0.0
        %446 = vmatprep.subr.mxu0 0.0
        %447 = vmatpush1.msra.mxu0 0.0
        %448 = vmatprep.subr.mxu0 0.0
        %449 = vmatpush1.msra.mxu0 0.0
        %450 = vmatprep.subr.mxu0 0.0
        %451 = vmatpush1.msra.mxu0 0.0
        %452 = vmatprep.subr.mxu0 0.0
        %453 = vmatpush1.msra.mxu0 0.0
        %454 = vmatprep.subr.mxu0 0.0
        %455 = vmatpush1.msra.mxu0 0.0
        %456 = vmatprep.mubr.f32.mxu0 0.0
        %457 = vmatmul.mubr.f32.gmra.mrb[0].mxu0 %v384
        %v458 = vpop.f32.mrb[0].mxu0
        %v459 = vadd.f32 0.0, %v458
        %v460 = vpop.f32.mrb[0].mxu0
        %461 = vmatprep.mubr.f32.mxu0 0.0
        %462 = vmatmul.mubr.f32.gmra.mrb[0].mxu0 %v387
        %v463 = vpop.f32.mrb[0].mxu0
        %v464 = vadd.f32 0.0, %v463
        %v465 = vpop.f32.mrb[0].mxu0
        %466 = vdwg.mxu0
        %v467 = vsel %vm356, 1, 0
        %vm468 = vcmp.eq.s32.totalorder %v467, 1
        %v469 = vsel %vm468, %v459, %v464
        %471 = vset.pattern.permute.xlu0 0
        %472 = vperm.xlu0 %471, %v360
        %v473 = vpop.permute.xlu0 %472
        %v475 = vadd.f32 %v469, %v473
        %476 = vrot.lane.b32.xlu0 %v475, 127
        %v477 = vpop.permute.xlu0 %476
        %v478 = vsel %vm370, 0.0, %v477
        %479 = vrot.lane.b32.xlu0 %v475, 1
        %v480 = vpop.permute.xlu0 %479
        %v481 = vsel %vm375, 0.0, %v480
        %483 = vset.pattern.permute.xlu0 0
        %484 = vperm.xlu0 %483, %v362
        %v485 = vpop.permute.xlu0 %484
        %vm487 = vcmask 195584
        %v489 = vsel %vm487, %v361, 0
        %491 = vmatprep.subr.mxu0 0.0
        %492 = vmatpush1.msra.mxu0 %v478
        %493 = vmatprep.subr.mxu0 0.0
        %494 = vmatpush1.msra.mxu0 %v475
        %495 = vmatprep.subr.mxu0 0.0
        %496 = vmatpush1.msra.mxu0 %v481
        %497 = vmatprep.subr.mxu0 0.0
        %498 = vmatpush1.msra.mxu0 0.0
        %499 = vmatprep.subr.mxu0 0.0
        %500 = vmatpush1.msra.mxu0 0.0
        %501 = vmatprep.subr.mxu0 0.0
        %502 = vmatpush1.msra.mxu0 0.0
        %503 = vmatprep.subr.mxu0 0.0
        %504 = vmatpush1.msra.mxu0 0.0
        %505 = vmatprep.subr.mxu0 0.0
        %506 = vmatpush1.msra.mxu0 0.0
        %507 = vmatprep.subr.mxu0 0.0
        %508 = vmatpush1.msra.mxu0 0.0
        %509 = vmatprep.subr.mxu0 0.0
        %510 = vmatpush1.msra.mxu0 0.0
        %511 = vmatprep.subr.mxu0 0.0
        %512 = vmatpush1.msra.mxu0 0.0
        %513 = vmatprep.subr.mxu0 0.0
        %514 = vmatpush1.msra.mxu0 0.0
        %515 = vmatprep.subr.mxu0 0.0
        %516 = vmatpush1.msra.mxu0 0.0
        %517 = vmatprep.subr.mxu0 0.0
        %518 = vmatpush1.msra.mxu0 0.0
        %519 = vmatprep.subr.mxu0 0.0
        %520 = vmatpush1.msra.mxu0 0.0
        %521 = vmatprep.subr.mxu0 0.0
        %522 = vmatpush1.msra.mxu0 0.0
        %523 = vmatprep.subr.mxu0 0.0
        %524 = vmatpush1.msra.mxu0 0.0
        %525 = vmatprep.subr.mxu0 0.0
        %526 = vmatpush1.msra.mxu0 0.0
        %527 = vmatprep.subr.mxu0 0.0
        %528 = vmatpush1.msra.mxu0 0.0
        %529 = vmatprep.subr.mxu0 0.0
        %530 = vmatpush1.msra.mxu0 0.0
        %531 = vmatprep.subr.mxu0 0.0
        %532 = vmatpush1.msra.mxu0 0.0
        %533 = vmatprep.subr.mxu0 0.0
        %534 = vmatpush1.msra.mxu0 0.0
        %535 = vmatprep.subr.mxu0 0.0
        %536 = vmatpush1.msra.mxu0 0.0
        %537 = vmatprep.subr.mxu0 0.0
        %538 = vmatpush1.msra.mxu0 0.0
        %539 = vmatprep.subr.mxu0 0.0
        %540 = vmatpush1.msra.mxu0 0.0
        %541 = vmatprep.subr.mxu0 0.0
        %542 = vmatpush1.msra.mxu0 0.0
        %543 = vmatprep.subr.mxu0 0.0
        %544 = vmatpush1.msra.mxu0 0.0
        %545 = vmatprep.subr.mxu0 0.0
        %546 = vmatpush1.msra.mxu0 0.0
        %547 = vmatprep.subr.mxu0 0.0
        %548 = vmatpush1.msra.mxu0 0.0
        %549 = vmatprep.subr.mxu0 0.0
        %550 = vmatpush1.msra.mxu0 0.0
        %551 = vmatprep.subr.mxu0 0.0
        %552 = vmatpush1.msra.mxu0 0.0
        %553 = vmatprep.subr.mxu0 0.0
        %554 = vmatpush1.msra.mxu0 0.0
        %555 = vmatprep.mubr.f32.mxu0 0.0
        %556 = vmatmul.mubr.f32.gmra.mrb[0].mxu0 %v489
        %v557 = vpop.f32.mrb[0].mxu0
        %v558 = vadd.f32 %v485, %v557
        %v559 = vpop.f32.mrb[0].mxu0
        %560 = vdwg.mxu0
        %v561 = vmax.f32 %v558, 0.0
        %562 = vrot.lane.b32.xlu0 %v561, 127
        %v563 = vpop.permute.xlu0 %562
        %v564 = vsel %vm370, 0.0, %v563
        %565 = vrot.lane.b32.xlu0 %v561, 1
        %v566 = vpop.permute.xlu0 %565
        %v567 = vsel %vm375, 0.0, %v566
        %569 = vset.pattern.permute.xlu0 0
        %570 = vperm.xlu0 %569, %v364
        %v571 = vpop.permute.xlu0 %570
        %v574 = vsel %vm487, %v363, 0
        %576 = vmatprep.subr.mxu0 0.0
        %577 = vmatpush1.msra.mxu0 %v564
        %578 = vmatprep.subr.mxu0 0.0
        %579 = vmatpush1.msra.mxu0 %v561
        %580 = vmatprep.subr.mxu0 0.0
        %581 = vmatpush1.msra.mxu0 %v567
        %582 = vmatprep.subr.mxu0 0.0
        %583 = vmatpush1.msra.mxu0 0.0
        %584 = vmatprep.subr.mxu0 0.0
        %585 = vmatpush1.msra.mxu0 0.0
        %586 = vmatprep.subr.mxu0 0.0
        %587 = vmatpush1.msra.mxu0 0.0
        %588 = vmatprep.subr.mxu0 0.0
        %589 = vmatpush1.msra.mxu0 0.0
        %590 = vmatprep.subr.mxu0 0.0
        %591 = vmatpush1.msra.mxu0 0.0
        %592 = vmatprep.subr.mxu0 0.0
        %593 = vmatpush1.msra.mxu0 0.0
        %594 = vmatprep.subr.mxu0 0.0
        %595 = vmatpush1.msra.mxu0 0.0
        %596 = vmatprep.subr.mxu0 0.0
        %597 = vmatpush1.msra.mxu0 0.0
        %598 = vmatprep.subr.mxu0 0.0
        %599 = vmatpush1.msra.mxu0 0.0
        %600 = vmatprep.subr.mxu0 0.0
        %601 = vmatpush1.msra.mxu0 0.0
        %602 = vmatprep.subr.mxu0 0.0
        %603 = vmatpush1.msra.mxu0 0.0
        %604 = vmatprep.subr.mxu0 0.0
        %605 = vmatpush1.msra.mxu0 0.0
        %606 = vmatprep.subr.mxu0 0.0
        %607 = vmatpush1.msra.mxu0 0.0
        %608 = vmatprep.subr.mxu0 0.0
        %609 = vmatpush1.msra.mxu0 0.0
        %610 = vmatprep.subr.mxu0 0.0
        %611 = vmatpush1.msra.mxu0 0.0
        %612 = vmatprep.subr.mxu0 0.0
        %613 = vmatpush1.msra.mxu0 0.0
        %614 = vmatprep.subr.mxu0 0.0
        %615 = vmatpush1.msra.mxu0 0.0
        %616 = vmatprep.subr.mxu0 0.0
        %617 = vmatpush1.msra.mxu0 0.0
        %618 = vmatprep.subr.mxu0 0.0
        %619 = vmatpush1.msra.mxu0 0.0
        %620 = vmatprep.subr.mxu0 0.0
        %621 = vmatpush1.msra.mxu0 0.0
        %622 = vmatprep.subr.mxu0 0.0
        %623 = vmatpush1.msra.mxu0 0.0
        %624 = vmatprep.subr.mxu0 0.0
        %625 = vmatpush1.msra.mxu0 0.0
        %626 = vmatprep.subr.mxu0 0.0
        %627 = vmatpush1.msra.mxu0 0.0
        %628 = vmatprep.subr.mxu0 0.0
        %629 = vmatpush1.msra.mxu0 0.0
        %630 = vmatprep.subr.mxu0 0.0
        %631 = vmatpush1.msra.mxu0 0.0
        %632 = vmatprep.subr.mxu0 0.0
        %633 = vmatpush1.msra.mxu0 0.0
        %634 = vmatprep.subr.mxu0 0.0
        %635 = vmatpush1.msra.mxu0 0.0
        %636 = vmatprep.subr.mxu0 0.0
        %637 = vmatpush1.msra.mxu0 0.0
        %638 = vmatprep.subr.mxu0 0.0
        %639 = vmatpush1.msra.mxu0 0.0
        %640 = vmatprep.mubr.f32.mxu0 0.0
        %641 = vmatmul.mubr.f32.gmra.mrb[0].mxu0 %v574
        %v642 = vpop.f32.mrb[0].mxu0
        %v643 = vadd.f32 %v571, %v642
        %v644 = vpop.f32.mrb[0].mxu0
        %645 = vdwg.mxu0
        %v646 = vadd.f32 %v643, %v475
        %v647 = vmax.f32 %v646, 0.0
        %649 = vset.pattern.permute.xlu0 0
        %650 = vperm.xlu0 %649, %v366
        %v651 = vpop.permute.xlu0 %650
        %vm653 = vcmask 64512
        %v655 = vsel %vm653, %v365, 0
        %657 = vmatprep.subr.mxu0 0.0
        %658 = vmatpush1.msra.mxu0 %v647
        %659 = vmatprep.subr.mxu0 0.0
        %660 = vmatpush1.msra.mxu0 0.0
        %661 = vmatprep.subr.mxu0 0.0
        %662 = vmatpush1.msra.mxu0 0.0
        %663 = vmatprep.subr.mxu0 0.0
        %664 = vmatpush1.msra.mxu0 0.0
        %665 = vmatprep.subr.mxu0 0.0
        %666 = vmatpush1.msra.mxu0 0.0
        %667 = vmatprep.subr.mxu0 0.0
        %668 = vmatpush1.msra.mxu0 0.0
        %669 = vmatprep.subr.mxu0 0.0
        %670 = vmatpush1.msra.mxu0 0.0
        %671 = vmatprep.subr.mxu0 0.0
        %672 = vmatpush1.msra.mxu0 0.0
        %673 = vmatprep.subr.mxu0 0.0
        %674 = vmatpush1.msra.mxu0 0.0
        %675 = vmatprep.subr.mxu0 0.0
        %676 = vmatpush1.msra.mxu0 0.0
        %677 = vmatprep.subr.mxu0 0.0
        %678 = vmatpush1.msra.mxu0 0.0
        %679 = vmatprep.subr.mxu0 0.0
        %680 = vmatpush1.msra.mxu0 0.0
        %681 = vmatprep.subr.mxu0 0.0
        %682 = vmatpush1.msra.mxu0 0.0
        %683 = vmatprep.subr.mxu0 0.0
        %684 = vmatpush1.msra.mxu0 0.0
        %685 = vmatprep.subr.mxu0 0.0
        %686 = vmatpush1.msra.mxu0 0.0
        %687 = vmatprep.subr.mxu0 0.0
        %688 = vmatpush1.msra.mxu0 0.0
        %689 = vmatprep.subr.mxu0 0.0
        %690 = vmatpush1.msra.mxu0 0.0
        %691 = vmatprep.subr.mxu0 0.0
        %692 = vmatpush1.msra.mxu0 0.0
        %693 = vmatprep.subr.mxu0 0.0
        %694 = vmatpush1.msra.mxu0 0.0
        %695 = vmatprep.subr.mxu0 0.0
        %696 = vmatpush1.msra.mxu0 0.0
        %697 = vmatprep.subr.mxu0 0.0
        %698 = vmatpush1.msra.mxu0 0.0
        %699 = vmatprep.subr.mxu0 0.0
        %700 = vmatpush1.msra.mxu0 0.0
        %701 = vmatprep.subr.mxu0 0.0
        %702 = vmatpush1.msra.mxu0 0.0
        %703 = vmatprep.subr.mxu0 0.0
        %704 = vmatpush1.msra.mxu0 0.0
        %705 = vmatprep.subr.mxu0 0.0
        %706 = vmatpush1.msra.mxu0 0.0
        %707 = vmatprep.subr.mxu0 0.0
        %708 = vmatpush1.msra.mxu0 0.0
        %709 = vmatprep.subr.mxu0 0.0
        %710 = vmatpush1.msra.mxu0 0.0
        %711 = vmatprep.subr.mxu0 0.0
        %712 = vmatpush1.msra.mxu0 0.0
        %713 = vmatprep.subr.mxu0 0.0
        %714 = vmatpush1.msra.mxu0 0.0
        %715 = vmatprep.subr.mxu0 0.0
        %716 = vmatpush1.msra.mxu0 0.0
        %717 = vmatprep.subr.mxu0 0.0
        %718 = vmatpush1.msra.mxu0 0.0
        %719 = vmatprep.subr.mxu0 0.0
        %720 = vmatpush1.msra.mxu0 0.0
        %721 = vmatprep.mubr.f32.mxu0 0.0
        %722 = vmatmul.mubr.f32.gmra.mrb[0].mxu0 %v655
        %v723 = vpop.f32.mrb[0].mxu0
        %v724 = vadd.f32 %v651, %v723
        %v725 = vpop.f32.mrb[0].mxu0
        %726 = vdwg.mxu0
        %727 = vst [vmem:[%s323] sm:$0xff] %v724
        %s728 = sand.u32 %s225, 1
        %s729 = scalar_lea.sflag [#allocation3], %s728
        %s730 = sand.u32 %s225, 1
        %s731 = smul.addr %s730, 8
        %s732 = scalar_lea.vmem [#allocation2], %s731
        // Predicated region
        $region57: #{identity_block4_forward.1} parent=55 // pred_check
          %p733 = pneg %p235
        $region58: #{identity_block4_forward.1} parent=55 // pred_check_branch
          %735 = sbr.rel (%p733) target = $region60
        $region59: #{identity_block4_forward.1} parent=55 // pred_region
          %s737 = ssub.s32 128, 128
          %738 = vsyncadd %s729, %s737
          %s739 = smul.addr %s23, 128
          %s740 = scalar_lea.hbm %s9, %s739
          %s742 = sshll.u32 %s732, 4
          %s743 = int_to_ptr.vmem [resolvable:$true] %s742
          %745 = dma.vmem_to_hbm [thread:$0]  %s743, 128, %s740, %s729
        $region60: #{identity_block4_forward.1} parent=55 // pred_fallthru
          _
      $region56: #{identity_block4_forward.1} parent=5 // pred_fallthru
        _
      %p746 = scmp.le.s32.totalorder 2, %s18
      // Predicated region
      $region61: #{identity_block4_forward.1} parent=5 // pred_check
        %p747 = pneg %p746
      $region62: #{identity_block4_forward.1} parent=5 // pred_check_branch
        %749 = sbr.rel (%p747) target = $region64
      $region63: #{identity_block4_forward.1} parent=5 // pred_region
        %s750 = ssub.s32 %s18, 2
        // Predicated region
        $region65: #{identity_block4_forward.1} parent=63 // pred_check
          %p751 = pneg %p241
        $region66: #{identity_block4_forward.1} parent=63 // pred_check_branch
          %753 = sbr.rel (%p751) target = $region68
        $region67: #{identity_block4_forward.1} parent=63 // pred_region
          %s754 = sand.u32 %s226, 1
          %s755 = scalar_lea.sflag [#allocation3], %s754
          %s756 = sand.u32 %s226, 1
          %s757 = smul.addr %s756, 8
          %s758 = scalar_lea.vmem [#allocation2], %s757
          %759 = dma.done %s755, 128
        $region68: #{identity_block4_forward.1} parent=63 // pred_fallthru
          _
      $region64: #{identity_block4_forward.1} parent=5 // pred_fallthru
        _
    $region6: #{identity_block4_forward.1} parent=1 // loop_footer
      %s22 = sadd.s32 1, %s18
    $region7: #{identity_block4_forward.1} parent=1 // loop_footer_branch
      %17 = sbr.rel target = $region3
    $region8: #{identity_block4_forward.1} parent=1 // loop_exit
      _
    %760 = vsyncpa [#allocation3], 1
    %s761 = scalar_lea.sflag [#allocation3], 1
    %762 = vsyncpa %s761, 1

</llo_original>
